<compile_context>
chip_gen: v5e
topology: v5e:2x2
jax: 0.10.0
libtpu: 0.0.40
codegen_flags: <defaults>
</compile_context>

<pallas_src>
import functools
import math

import jax
import jax.numpy as jnp
from jax import lax
from jax.experimental import pallas as pl
from jax.experimental.pallas import tpu as pltpu

_EPS = 1e-5
# Sized for v7x's 64 MiB physical VMEM (with headroom); also above the 16/32 MiB
# scoped defaults on v5e/v6e so larger tiles stay double-buffered.
_VMEM_LIMIT = 48 * 1024 * 1024


# --------------------------- tile-size helpers -------------------------------

def _pick_hw_tile(hw, max_tile=1024):
    """Largest multiple-of-128 divisor of hw that is <= max_tile, else full hw."""
    if hw % 128 != 0:
        return hw                       # full-dim block (always layout-legal)
    best = 128
    t = 256
    while t <= min(hw, max_tile):
        if hw % t == 0:
            best = t
        t += 128
    return best


def _pick_c_tile(c, max_tile=128):
    """Largest multiple-of-8 divisor of c that is <= max_tile, else full c."""
    if c <= max_tile:
        return c
    best = None
    d = 8
    while d <= max_tile:
        if c % d == 0:
            best = d
        d += 8
    return best if best is not None else c


def _params(dim_sem):
    return pltpu.CompilerParams(dimension_semantics=dim_sem,
                                vmem_limit_bytes=_VMEM_LIMIT)


# --------------------------- Pallas kernels ----------------------------------

def _aligned_stats_kernel(w_ref, b_ref, s_ref, mu_ref, sc_ref, sum_ref, sq_ref,
                          *, eps, inv_count):
    """Single-pass per-channel sum / sum-of-squares of the aligned student."""
    i = pl.program_id(0)          # batch index
    j = pl.program_id(1)          # HW block index

    @pl.when(jnp.logical_and(i == 0, j == 0))
    def _():
        sum_ref[...] = jnp.zeros_like(sum_ref)
        sq_ref[...] = jnp.zeros_like(sq_ref)

    s = s_ref[0].astype(jnp.float32)                      # (Cs, hw_t)
    w = w_ref[...].astype(jnp.float32)                    # (Ct, Cs)
    y = jnp.dot(w, s, preferred_element_type=jnp.float32) + b_ref[...]  # (Ct, hw_t)

    sum_ref[...] += jnp.sum(y, axis=-1, keepdims=True)
    sq_ref[...] += jnp.sum(y * y, axis=-1, keepdims=True)

    @pl.when(jnp.logical_and(i == pl.num_programs(0) - 1,
                             j == pl.num_programs(1) - 1))
    def _():
        mu = sum_ref[...] * inv_count
        var = sq_ref[...] * inv_count - mu * mu           # biased (train-mode) var
        mu_ref[...] = mu
        sc_ref[...] = lax.rsqrt(jnp.maximum(var, 0.0) + eps)


def _bn_stats_kernel(x_ref, mu_ref, sc_ref, sum_ref, sq_ref, *, eps, inv_count):
    """Single-pass per-channel sum / sum-of-squares of the raw teacher."""
    i = pl.program_id(0)
    j = pl.program_id(1)

    @pl.when(jnp.logical_and(i == 0, j == 0))
    def _():
        sum_ref[...] = jnp.zeros_like(sum_ref)
        sq_ref[...] = jnp.zeros_like(sq_ref)

    x = x_ref[0].astype(jnp.float32)                      # (C, hw_t)
    sum_ref[...] += jnp.sum(x, axis=-1, keepdims=True)
    sq_ref[...] += jnp.sum(x * x, axis=-1, keepdims=True)

    @pl.when(jnp.logical_and(i == pl.num_programs(0) - 1,
                             j == pl.num_programs(1) - 1))
    def _():
        mu = sum_ref[...] * inv_count
        var = sq_ref[...] * inv_count - mu * mu
        mu_ref[...] = mu
        sc_ref[...] = lax.rsqrt(jnp.maximum(var, 0.0) + eps)


def _cwd_kernel(w_ref, b_ref, mu_s_ref, sc_s_ref, mu_t_ref, sc_t_ref,
                s_ref, t_ref, out_ref, *, inv_tau, tau2_inv_cn):
    """Fused align-matmul + BN + channel-wise KL for one (batch, c-block) cell."""
    s = s_ref[0].astype(jnp.float32)                      # (Cs, HW)
    t = t_ref[0].astype(jnp.float32)                      # (Ct_blk, HW)
    w = w_ref[...].astype(jnp.float32)                    # (Ct_blk, Cs)

    y = jnp.dot(w, s, preferred_element_type=jnp.float32) + b_ref[...]
    zs = (y - mu_s_ref[...]) * (sc_s_ref[...] * inv_tau)  # BN + 1/tau fused
    zt = (t - mu_t_ref[...]) * (sc_t_ref[...] * inv_tau)

    # Teacher: single exp pass; approx reciprocal keeps the divide off the VALU.
    mt = jnp.max(zt, axis=-1, keepdims=True)
    et = jnp.exp(zt - mt)
    dt = jnp.sum(et, axis=-1, keepdims=True)
    p_t = et * pl.reciprocal(dt, approx=True)
    ls_t = (zt - mt) - jnp.log(dt)

    # Student: only log-softmax needed.
    ms = jnp.max(zs, axis=-1, keepdims=True)
    ds = jnp.sum(jnp.exp(zs - ms), axis=-1, keepdims=True)
    ls_s = (zs - ms) - jnp.log(ds)

    kl = jnp.sum(p_t * (ls_t - ls_s), keepdims=True)      # (1, 1)
    out_ref[...] = (kl * tau2_inv_cn).reshape(1, 1, 1, 1)


# --------------------------- pallas_call wrappers -----------------------------

def _aligned_stats(s3, w, b):
    n, cs, hw = s3.shape
    ct = w.shape[0]
    hw_t = _pick_hw_tile(hw)
    grid = (n, hw // hw_t)
    return pl.pallas_call(
        functools.partial(_aligned_stats_kernel, eps=_EPS,
                          inv_count=1.0 / float(n * hw)),
        grid=grid,
        in_specs=[
            pl.BlockSpec((ct, cs), lambda i, j: (0, 0)),
            pl.BlockSpec((ct, 1), lambda i, j: (0, 0)),
            pl.BlockSpec((1, cs, hw_t), lambda i, j: (i, 0, j)),
        ],
        out_specs=[
            pl.BlockSpec((ct, 1), lambda i, j: (0, 0)),
            pl.BlockSpec((ct, 1), lambda i, j: (0, 0)),
        ],
        out_shape=[
            jax.ShapeDtypeStruct((ct, 1), jnp.float32),
            jax.ShapeDtypeStruct((ct, 1), jnp.float32),
        ],
        scratch_shapes=[pltpu.VMEM((ct, 1), jnp.float32),
                        pltpu.VMEM((ct, 1), jnp.float32)],
        compiler_params=_params(("arbitrary", "arbitrary")),
    )(w, b, s3)


def _bn_stats(x3):
    n, c, hw = x3.shape
    hw_t = _pick_hw_tile(hw)
    grid = (n, hw // hw_t)
    return pl.pallas_call(
        functools.partial(_bn_stats_kernel, eps=_EPS,
                          inv_count=1.0 / float(n * hw)),
        grid=grid,
        in_specs=[pl.BlockSpec((1, c, hw_t), lambda i, j: (i, 0, j))],
        out_specs=[
            pl.BlockSpec((c, 1), lambda i, j: (0, 0)),
            pl.BlockSpec((c, 1), lambda i, j: (0, 0)),
        ],
        out_shape=[
            jax.ShapeDtypeStruct((c, 1), jnp.float32),
            jax.ShapeDtypeStruct((c, 1), jnp.float32),
        ],
        scratch_shapes=[pltpu.VMEM((c, 1), jnp.float32),
                        pltpu.VMEM((c, 1), jnp.float32)],
        compiler_params=_params(("arbitrary", "arbitrary")),
    )(x3)


def _cwd_loss(s3, t3, w, b, mu_s, sc_s, mu_t, sc_t, tau):
    n, cs, hw = s3.shape
    ct = t3.shape[1]
    ct_blk = _pick_c_tile(ct)
    n_cb = ct // ct_blk
    parts = pl.pallas_call(
        functools.partial(_cwd_kernel, inv_tau=1.0 / tau,
                          tau2_inv_cn=(tau * tau) / float(ct * n)),
        grid=(n, n_cb),
        in_specs=[
            pl.BlockSpec((ct_blk, cs), lambda i, j: (j, 0)),       # W
            pl.BlockSpec((ct_blk, 1), lambda i, j: (j, 0)),        # bias
            pl.BlockSpec((ct_blk, 1), lambda i, j: (j, 0)),        # mu_s
            pl.BlockSpec((ct_blk, 1), lambda i, j: (j, 0)),        # scale_s
            pl.BlockSpec((ct_blk, 1), lambda i, j: (j, 0)),        # mu_t
            pl.BlockSpec((ct_blk, 1), lambda i, j: (j, 0)),        # scale_t
            pl.BlockSpec((1, cs, hw), lambda i, j: (i, 0, 0)),     # student
            pl.BlockSpec((1, ct_blk, hw), lambda i, j: (i, j, 0)), # teacher
        ],
        out_specs=pl.BlockSpec((1, 1, 1, 1), lambda i, j: (i, j, 0, 0)),
        out_shape=jax.ShapeDtypeStruct((n, n_cb, 1, 1), jnp.float32),
        compiler_params=_params(("parallel", "parallel")),
    )(w, b, mu_s, sc_s, mu_t, sc_t, s3, t3)
    return jnp.sum(parts)


# --------------------------- FeatureLoss port ---------------------------------

class FeatureLossPallas:
    """FeatureLoss(channels_s, channels_t, distiller='cwd', loss_weight)."""

    def __init__(self, channels_s, channels_t, loss_weight=1.0, tau=1.0, key=None):
        if key is None:
            key = jax.random.PRNGKey(0)
        self.loss_weight = float(loss_weight)
        self.tau = float(tau)
        self.weights, self.biases = [], []
        for cs, ct in zip(channels_s, channels_t):
            key, kw, kb = jax.random.split(key, 3)
            bound = 1.0 / math.sqrt(cs)   # PyTorch Conv2d default init bound (k=1)
            self.weights.append(jax.random.uniform(kw, (ct, cs), jnp.float32, -bound, bound))
            self.biases.append(jax.random.uniform(kb, (ct, 1), jnp.float32, -bound, bound))

    def __call__(self, y_s, y_t):
        assert len(y_s) == len(y_t)
        total = jnp.float32(0.0)
        for idx, (s, t) in enumerate(zip(y_s, y_t)):
            n, cs, h, w_ = s.shape
            ct = t.shape[1]
            hw = h * w_
            # Free reshapes (no transpose, no HBM copy); kernels widen to f32 after
            # load, so bf16 feature maps are supported at half the HBM traffic.
            s3 = s.reshape(n, cs, hw)
            t3 = t.reshape(n, ct, hw)
            w, b = self.weights[idx], self.biases[idx]
            mu_s, sc_s = _aligned_stats(s3, w, b)   # pass 1a: aligned-student BN stats
            mu_t, sc_t = _bn_stats(t3)              # pass 1b: teacher BN stats
            total = total + _cwd_loss(s3, t3, w, b, mu_s, sc_s, mu_t, sc_t, self.tau)
        return self.loss_weight * total


# --------------------------- pure-JAX reference --------------------------------

def _reference(y_s, y_t, weights, biases, loss_weight=1.0, tau=1.0):
    total = jnp.float32(0.0)
    for s, t, w, b in zip(y_s, y_t, weights, biases):
        n, _, h, wd = s.shape
        ct = t.shape[1]
        sa = jnp.einsum('ncij,oc->noij', s.astype(jnp.float32), w) + b.reshape(1, ct, 1, 1)

        def bn(x):
            mu = jnp.mean(x, axis=(0, 2, 3), keepdims=True)
            var = jnp.mean((x - mu) ** 2, axis=(0, 2, 3), keepdims=True)
            return (x - mu) / jnp.sqrt(var + _EPS)

        sn = bn(sa)
        tn = bn(t.astype(jnp.float32))
        sr = sn.reshape(-1, h * wd) / tau
        tr = tn.reshape(-1, h * wd) / tau
        p_t = jax.nn.softmax(tr, axis=1)
        cost = jnp.sum(p_t * (jax.nn.log_softmax(tr, 1) - jax.nn.log_softmax(sr, 1))) * tau ** 2
        total = total + cost / (ct * n)
    return loss_weight * total


# ------------------------------- main ------------------------------------------

if __name__ == "__main__":
    key = jax.random.PRNGKey(0)
    channels_s = [8, 16]
    channels_t = [16, 32]
    k1, k2, k3, k4 = jax.random.split(key, 4)
    y_s = [
        jax.random.normal(k1, (2, 8, 16, 16), jnp.float32),
        jax.random.normal(k2, (2, 16, 8, 8), jnp.float32),
    ]
    y_t = [
        jax.random.normal(k3, (2, 16, 16, 16), jnp.float32),
        jax.random.normal(k4, (2, 32, 8, 8), jnp.float32),
    ]

    loss_mod = FeatureLossPallas(channels_s, channels_t, loss_weight=1.0, tau=1.0,
                                 key=jax.random.PRNGKey(0))
    loss = loss_mod(y_s, y_t)
    jax.block_until_ready(loss)

    ref = _reference(y_s, y_t, loss_mod.weights, loss_mod.biases)
    jax.block_until_ready(ref)
    assert jnp.allclose(loss, ref, rtol=2e-3, atol=1e-3), (loss, ref)

    print("KERNEL_OK")
</pallas_src>

<mosaic_0001>
module attributes {stable_mosaic.version = 11 : i64} {
  func.func @_aligned_stats_kernel(%arg0: i32, %arg1: i32, %arg2: memref<16x8xf32, #tpu.memory_space<vmem>>, %arg3: memref<16x1xf32, #tpu.memory_space<vmem>>, %arg4: memref<1x8x256xf32, #tpu.memory_space<vmem>>, %arg5: memref<16x1xf32, #tpu.memory_space<vmem>>, %arg6: memref<16x1xf32, #tpu.memory_space<vmem>>, %arg7: memref<16x1xf32, #tpu.memory_space<vmem>>, %arg8: memref<16x1xf32, #tpu.memory_space<vmem>>) attributes {dimension_semantics = [#tpu.dimension_semantics<arbitrary>, #tpu.dimension_semantics<arbitrary>], iteration_bounds = array<i64: 2, 1>, scalar_prefetch = 0 : i64, scratch_operands = 2 : i64, tpu.core_type = #tpu.core_type<tc>, window_params = [{pipeline_mode = #tpu.pipeline_mode<synchronous>, transform_indices = @transform_0, window_bounds = array<i64: 16, 8>}, {pipeline_mode = #tpu.pipeline_mode<synchronous>, transform_indices = @transform_1, window_bounds = array<i64: 16, 1>}, {transform_indices = @transform_2, window_bounds = array<i64: 1, 8, 256>}, {pipeline_mode = #tpu.pipeline_mode<synchronous>, transform_indices = @transform_3, window_bounds = array<i64: 16, 1>}, {pipeline_mode = #tpu.pipeline_mode<synchronous>, transform_indices = @transform_4, window_bounds = array<i64: 16, 1>}]} {
    %c0_i32 = arith.constant 0 : i32
    %0 = arith.cmpi eq, %arg0, %c0_i32 : i32
    %c0_i32_0 = arith.constant 0 : i32
    %1 = arith.cmpi eq, %arg1, %c0_i32_0 : i32
    %2 = arith.andi %0, %1 : i1
    %3 = arith.extui %2 : i1 to i32
    %c0_i32_1 = arith.constant 0 : i32
    %4 = arith.cmpi ne, %3, %c0_i32_1 : i32
    scf.if %4 {
      %cst_20 = arith.constant 0.000000e+00 : f32
      %28 = vector.broadcast %cst_20 : f32 to vector<16x1xf32>
      %c0_21 = arith.constant 0 : index
      %c0_22 = arith.constant 0 : index
      %29 = vector.load %arg7[%c0_21, %c0_22] : memref<16x1xf32, #tpu.memory_space<vmem>>, vector<16x1xf32>
      tpu.vector_store %arg7[%c0_21, %c0_22], %28 {strides = array<i32>} : memref<16x1xf32, #tpu.memory_space<vmem>>, vector<16x1xf32>,
      %cst_23 = arith.constant 0.000000e+00 : f32
      %30 = vector.broadcast %cst_23 : f32 to vector<16x1xf32>
      %c0_24 = arith.constant 0 : index
      %c0_25 = arith.constant 0 : index
      %31 = vector.load %arg8[%c0_24, %c0_25] : memref<16x1xf32, #tpu.memory_space<vmem>>, vector<16x1xf32>
      tpu.vector_store %arg8[%c0_24, %c0_25], %30 {strides = array<i32>} : memref<16x1xf32, #tpu.memory_space<vmem>>, vector<16x1xf32>,
    } else {
    }
    %c0 = arith.constant 0 : index
    %c0_2 = arith.constant 0 : index
    %c0_3 = arith.constant 0 : index
    %5 = vector.load %arg4[%c0, %c0_2, %c0_3] : memref<1x8x256xf32, #tpu.memory_space<vmem>>, vector<1x8x256xf32>
    %6 = vector.shape_cast %5 : vector<1x8x256xf32> to vector<8x256xf32>
    %c0_4 = arith.constant 0 : index
    %c0_5 = arith.constant 0 : index
    %7 = vector.load %arg2[%c0_4, %c0_5] : memref<16x8xf32, #tpu.memory_space<vmem>>, vector<16x8xf32>
    %cst = arith.constant dense<0.000000e+00> : vector<16x256xf32>
    %8 = tpu.matmul %7, %6, %cst {dimension_numbers = #tpu.dot_dimension_numbers<[1], [0], [0], [1], [0, 0, 1, 1], [], []>} : vector<16x8xf32>, vector<8x256xf32>, vector<16x256xf32> -> vector<16x256xf32>
    %c0_6 = arith.constant 0 : index
    %c0_7 = arith.constant 0 : index
    %9 = vector.load %arg3[%c0_6, %c0_7] : memref<16x1xf32, #tpu.memory_space<vmem>>, vector<16x1xf32>
    %10 = vector.broadcast %9 : vector<16x1xf32> to vector<16x256xf32>
    %11 = arith.addf %8, %10 : vector<16x256xf32>
    %c0_8 = arith.constant 0 : index
    %c0_9 = arith.constant 0 : index
    %12 = vector.load %arg7[%c0_8, %c0_9] : memref<16x1xf32, #tpu.memory_space<vmem>>, vector<16x1xf32>
    %cst_10 = arith.constant dense<0.000000e+00> : vector<16xf32>
    %13 = vector.multi_reduction <add>, %11, %cst_10 [1] : vector<16x256xf32> to vector<16xf32>
    %14 = vector.shape_cast %13 : vector<16xf32> to vector<16x1xf32>
    %15 = arith.addf %12, %14 : vector<16x1xf32>
    %c0_11 = arith.constant 0 : index
    %c0_12 = arith.constant 0 : index
    %16 = vector.load %arg7[%c0_11, %c0_12] : memref<16x1xf32, #tpu.memory_space<vmem>>, vector<16x1xf32>
    tpu.vector_store %arg7[%c0_11, %c0_12], %15 {strides = array<i32>} : memref<16x1xf32, #tpu.memory_space<vmem>>, vector<16x1xf32>,
    %c0_13 = arith.constant 0 : index
    %c0_14 = arith.constant 0 : index
    %17 = vector.load %arg8[%c0_13, %c0_14] : memref<16x1xf32, #tpu.memory_space<vmem>>, vector<16x1xf32>
    %18 = arith.mulf %11, %11 : vector<16x256xf32>
    %cst_15 = arith.constant dense<0.000000e+00> : vector<16xf32>
    %19 = vector.multi_reduction <add>, %18, %cst_15 [1] : vector<16x256xf32> to vector<16xf32>
    %20 = vector.shape_cast %19 : vector<16xf32> to vector<16x1xf32>
    %21 = arith.addf %17, %20 : vector<16x1xf32>
    %c0_16 = arith.constant 0 : index
    %c0_17 = arith.constant 0 : index
    %22 = vector.load %arg8[%c0_16, %c0_17] : memref<16x1xf32, #tpu.memory_space<vmem>>, vector<16x1xf32>
    tpu.vector_store %arg8[%c0_16, %c0_17], %21 {strides = array<i32>} : memref<16x1xf32, #tpu.memory_space<vmem>>, vector<16x1xf32>,
    %c1_i32 = arith.constant 1 : i32
    %23 = arith.cmpi eq, %arg0, %c1_i32 : i32
    %c0_i32_18 = arith.constant 0 : i32
    %24 = arith.cmpi eq, %arg1, %c0_i32_18 : i32
    %25 = arith.andi %23, %24 : i1
    %26 = arith.extui %25 : i1 to i32
    %c0_i32_19 = arith.constant 0 : i32
    %27 = arith.cmpi ne, %26, %c0_i32_19 : i32
    scf.if %27 {
      %c0_20 = arith.constant 0 : index
      %c0_21 = arith.constant 0 : index
      %28 = vector.load %arg7[%c0_20, %c0_21] : memref<16x1xf32, #tpu.memory_space<vmem>>, vector<16x1xf32>
      %cst_22 = arith.constant 0.001953125 : f32
      %29 = vector.broadcast %cst_22 : f32 to vector<16x1xf32>
      %30 = arith.mulf %28, %29 : vector<16x1xf32>
      %c0_23 = arith.constant 0 : index
      %c0_24 = arith.constant 0 : index
      %31 = vector.load %arg8[%c0_23, %c0_24] : memref<16x1xf32, #tpu.memory_space<vmem>>, vector<16x1xf32>
      %cst_25 = arith.constant 0.001953125 : f32
      %32 = vector.broadcast %cst_25 : f32 to vector<16x1xf32>
      %33 = arith.mulf %31, %32 : vector<16x1xf32>
      %34 = arith.mulf %30, %30 : vector<16x1xf32>
      %35 = arith.subf %33, %34 : vector<16x1xf32>
      %c0_26 = arith.constant 0 : index
      %c0_27 = arith.constant 0 : index
      %36 = vector.load %arg5[%c0_26, %c0_27] : memref<16x1xf32, #tpu.memory_space<vmem>>, vector<16x1xf32>
      tpu.vector_store %arg5[%c0_26, %c0_27], %30 {strides = array<i32>} : memref<16x1xf32, #tpu.memory_space<vmem>>, vector<16x1xf32>,
      %cst_28 = arith.constant 0.000000e+00 : f32
      %37 = vector.broadcast %cst_28 : f32 to vector<16x1xf32>
      %38 = arith.maximumf %35, %37 : vector<16x1xf32>
      %cst_29 = arith.constant 9.99999974E-6 : f32
      %39 = vector.broadcast %cst_29 : f32 to vector<16x1xf32>
      %40 = arith.addf %38, %39 : vector<16x1xf32>
      %41 = math.rsqrt %40 : vector<16x1xf32>
      %c0_30 = arith.constant 0 : index
      %c0_31 = arith.constant 0 : index
      %42 = vector.load %arg6[%c0_30, %c0_31] : memref<16x1xf32, #tpu.memory_space<vmem>>, vector<16x1xf32>
      tpu.vector_store %arg6[%c0_30, %c0_31], %41 {strides = array<i32>} : memref<16x1xf32, #tpu.memory_space<vmem>>, vector<16x1xf32>,
    } else {
    }
    return
  }
  func.func @transform_0(%arg0: i32, %arg1: i32) -> (i32, i32) {
    %c0_i32 = arith.constant 0 : i32
    %c0_i32_0 = arith.constant 0 : i32
    %c0_i32_1 = arith.constant 0 : i32
    return %c0_i32, %c0_i32_0 : i32, i32
  }
  func.func @transform_1(%arg0: i32, %arg1: i32) -> (i32, i32) {
    %c0_i32 = arith.constant 0 : i32
    %c0_i32_0 = arith.constant 0 : i32
    %c0_i32_1 = arith.constant 0 : i32
    return %c0_i32, %c0_i32_0 : i32, i32
  }
  func.func @transform_2(%arg0: i32, %arg1: i32) -> (i32, i32, i32) {
    %c0_i32 = arith.constant 0 : i32
    %c0_i32_0 = arith.constant 0 : i32
    return %arg0, %c0_i32, %arg1 : i32, i32, i32
  }
  func.func @transform_3(%arg0: i32, %arg1: i32) -> (i32, i32) {
    %c0_i32 = arith.constant 0 : i32
    %c0_i32_0 = arith.constant 0 : i32
    %c0_i32_1 = arith.constant 0 : i32
    return %c0_i32, %c0_i32_0 : i32, i32
  }
  func.func @transform_4(%arg0: i32, %arg1: i32) -> (i32, i32) {
    %c0_i32 = arith.constant 0 : i32
    %c0_i32_0 = arith.constant 0 : i32
    %c0_i32_1 = arith.constant 0 : i32
    return %c0_i32, %c0_i32_0 : i32, i32
  }
}

</mosaic_0001>

<llo_original>
// kernel: tpu_custom_call.1
$region0: #{tpu_custom_call.1}
  #allocation0 [shape = 'u32[]', space=smem, size = 0x4, offset = 0x4, fixed_abs, tag = 'smem constant byte address 0x4 - core index']
  #allocation1 [shape = 'u32[72,128]{1,0:T(1,128)}', space=vmem, size = 0x9000, scoped, tag = 'internal scratch']
  #allocation2 [shape = 'f32[16,1]{1,0:T(8,128)}', space=vmem, size = 0x2000, scoped, tag = 'scratch operand']
  #allocation3 [shape = 'f32[16,1]{1,0:T(8,128)}', space=vmem, size = 0x2000, scoped, tag = 'scratch operand']
  %s0 = inlined_call_operand.vmem [shape: f32[16,8], index: 0, kind: input, shape index: {}]
  %s1 = inlined_call_operand.vmem [shape: f32[16,1], index: 1, kind: input, shape index: {}]
  %s2 = inlined_call_operand.vmem [shape: f32[2,8,256], index: 2, kind: input, shape index: {}]
  %s3 = inlined_call_operand.vmem [shape: f32[16,1], index: 3, kind: output, shape index: {0}]
  %s4 = inlined_call_operand.vmem [shape: f32[16,1], index: 4, kind: output, shape index: {1}]
  %5 = xla_tuple %s3, %s4
  %s6 = sld [smem:[#allocation0]]
  $region61: #{tpu_custom_call.1} parent=0
    _
  %s8 = ssub.s32 1, %s6
  %s9 = scalar_select 0, %s8, %s6
  loop: start=0, step=1, limit=4
  $region2: #{tpu_custom_call.1} parent=0 // loop_pre_header
    _
  $region3: #{tpu_custom_call.1} parent=0 // loop_header
    %s11 = sphi 0, %s15
    %p12 = scmp.ge.s32.totalorder %s11, 4
    %s18 = sphi 0, %s30
    %s19 = sphi 0, %s26
    %s20 = sphi 0, %s18
    %s21 = sphi 0, %s19
    %s22 = sphi 0, %s20
    %s23 = sphi 0, %s21
    %s31 = sphi 0, %s31
    %s33 = sphi 0, %s31
    %s34 = sphi 0, %s33
    %s48 = sphi 0, %s34
    %s52 = sphi 0, %s52
    %s54 = sphi 0, %s52
    %s55 = sphi 0, %s54
    %s69 = sphi 0, %s55
    %s77 = sphi 0, %s79
    %s80 = sphi 0, %s77
    %s81 = sphi 0, %s80
    %s97 = sphi 0, %s81
    %s101 = sphi 0, %s101
    %s103 = sphi 0, %s101
    %s104 = sphi 0, %s103
    %s118 = sphi 0, %s104
    %s122 = sphi 0, %s122
    %s124 = sphi 0, %s122
    %s125 = sphi 0, %s124
    %s139 = sphi 0, %s125
  $region4: #{tpu_custom_call.1} parent=0 // loop_header_branch
    %14 = sbr.rel (%p12) target = $region8
  $region5: #{tpu_custom_call.1} parent=0 // loop_body
    %s16 = ssub.s32 %s11, 1
    %s17 = ssub.s32 %s11, 2
    %s24 = sadd.s32 1, %s19
    %p25 = scmp.ge.s32.totalorder %s24, 1
    %s26 = scalar_select %p25, 0, %s24
    %s27 = sadd.s32 1, %s18
    %s28 = scalar_select %p25, %s27, %s18
    %p29 = scmp.ge.s32.totalorder %s28, 2
    %s30 = scalar_select %p29, 0, %s28
    %s32 = sadd.s32 %s31, 1
    %p35 = scmp.eq.s32.totalorder %s11, 1
    %p36 = scmp.ne.s32.totalorder %s31, %s33
    %p37 = scmp.eq.s32.totalorder %s11, 0
    %p38 = por %p36, %p37
    %p39 = scmp.ne.s32.totalorder %s31, %s33
    %p40 = scmp.eq.s32.totalorder %s16, 1
    %p41 = por %p39, %p40
    %p42 = scmp.ne.s32.totalorder %s33, %s34
    %p43 = scmp.eq.s32.totalorder %s16, 0
    %p44 = por %p42, %p43
    %p45 = scmp.ne.s32.totalorder %s33, %s34
    %p46 = scmp.eq.s32.totalorder %s17, 1
    %p47 = por %p45, %p46
    %p49 = scmp.ne.s32.totalorder %s34, %s48
    %p50 = scmp.eq.s32.totalorder %s17, 0
    %p51 = por %p49, %p50
    %s53 = sadd.s32 %s52, 1
    %p56 = scmp.eq.s32.totalorder %s11, 1
    %p57 = scmp.ne.s32.totalorder %s52, %s54
    %p58 = scmp.eq.s32.totalorder %s11, 0
    %p59 = por %p57, %p58
    %p60 = scmp.ne.s32.totalorder %s52, %s54
    %p61 = scmp.eq.s32.totalorder %s16, 1
    %p62 = por %p60, %p61
    %p63 = scmp.ne.s32.totalorder %s54, %s55
    %p64 = scmp.eq.s32.totalorder %s16, 0
    %p65 = por %p63, %p64
    %p66 = scmp.ne.s32.totalorder %s54, %s55
    %p67 = scmp.eq.s32.totalorder %s17, 1
    %p68 = por %p66, %p67
    %p70 = scmp.ne.s32.totalorder %s55, %s69
    %p71 = scmp.eq.s32.totalorder %s17, 0
    %p72 = por %p70, %p71
    %s73 = ssub.s32 %s18, %s30
    %s74 = ssub.s32 %s19, %s26
    %s75 = sor.u32 %s73, %s74
    %p76 = scmp.eq.s32.totalorder %s75, 0
    %s78 = sadd.s32 %s77, 1
    %s79 = scalar_select %p76, %s77, %s78
    %p82 = pneg %p76
    %p83 = scmp.eq.s32.totalorder %s11, 1
    %p84 = por %p82, %p83
    %p85 = scmp.ne.s32.totalorder %s77, %s80
    %p86 = scmp.eq.s32.totalorder %s11, 0
    %p87 = por %p85, %p86
    %p88 = scmp.ne.s32.totalorder %s77, %s80
    %p89 = scmp.eq.s32.totalorder %s16, 1
    %p90 = por %p88, %p89
    %p91 = scmp.ne.s32.totalorder %s80, %s81
    %p92 = scmp.eq.s32.totalorder %s16, 0
    %p93 = por %p91, %p92
    %p94 = scmp.ne.s32.totalorder %s80, %s81
    %p95 = scmp.eq.s32.totalorder %s17, 1
    %p96 = por %p94, %p95
    %p98 = scmp.ne.s32.totalorder %s81, %s97
    %p99 = scmp.eq.s32.totalorder %s17, 0
    %p100 = por %p98, %p99
    %s102 = sadd.s32 %s101, 1
    %p105 = scmp.eq.s32.totalorder %s11, 1
    %p106 = scmp.ne.s32.totalorder %s101, %s103
    %p107 = scmp.eq.s32.totalorder %s11, 0
    %p108 = por %p106, %p107
    %p109 = scmp.ne.s32.totalorder %s101, %s103
    %p110 = scmp.eq.s32.totalorder %s16, 1
    %p111 = por %p109, %p110
    %p112 = scmp.ne.s32.totalorder %s103, %s104
    %p113 = scmp.eq.s32.totalorder %s16, 0
    %p114 = por %p112, %p113
    %p115 = scmp.ne.s32.totalorder %s103, %s104
    %p116 = scmp.eq.s32.totalorder %s17, 1
    %p117 = por %p115, %p116
    %p119 = scmp.ne.s32.totalorder %s104, %s118
    %p120 = scmp.eq.s32.totalorder %s17, 0
    %p121 = por %p119, %p120
    %s123 = sadd.s32 %s122, 1
    %p126 = scmp.eq.s32.totalorder %s11, 1
    %p127 = scmp.ne.s32.totalorder %s122, %s124
    %p128 = scmp.eq.s32.totalorder %s11, 0
    %p129 = por %p127, %p128
    %p130 = scmp.ne.s32.totalorder %s122, %s124
    %p131 = scmp.eq.s32.totalorder %s16, 1
    %p132 = por %p130, %p131
    %p133 = scmp.ne.s32.totalorder %s124, %s125
    %p134 = scmp.eq.s32.totalorder %s16, 0
    %p135 = por %p133, %p134
    %p136 = scmp.ne.s32.totalorder %s124, %s125
    %p137 = scmp.eq.s32.totalorder %s17, 1
    %p138 = por %p136, %p137
    %p140 = scmp.ne.s32.totalorder %s125, %s139
    %p141 = scmp.eq.s32.totalorder %s17, 0
    %p142 = por %p140, %p141
    %p143 = scmp.le.s32.totalorder 1, %s11
    %p144 = scmp.lt.s32.totalorder %s11, 3
    %p145 = pnand %p143, %p144
    %p146 = pneg %p145
    // Predicated region
    $region9: #{tpu_custom_call.1} parent=5 // pred_check
      _
    $region10: #{tpu_custom_call.1} parent=5 // pred_check_branch
      %148 = sbr.rel (%p145) target = $region12
    $region11: #{tpu_custom_call.1} parent=5 // pred_region
      %s149 = ssub.s32 %s11, 1
      // Predicated region
      $region13: #{tpu_custom_call.1} parent=11 // pred_check
        %p150 = pneg %p44
      $region14: #{tpu_custom_call.1} parent=11 // pred_check_branch
        %152 = sbr.rel (%p150) target = $region16
      $region15: #{tpu_custom_call.1} parent=11 // pred_region
        _
      $region16: #{tpu_custom_call.1} parent=11 // pred_fallthru
        _
      // Predicated region
      $region17: #{tpu_custom_call.1} parent=11 // pred_check
        %p153 = pneg %p65
      $region18: #{tpu_custom_call.1} parent=11 // pred_check_branch
        %155 = sbr.rel (%p153) target = $region20
      $region19: #{tpu_custom_call.1} parent=11 // pred_region
        _
      $region20: #{tpu_custom_call.1} parent=11 // pred_fallthru
        _
    $region12: #{tpu_custom_call.1} parent=5 // pred_fallthru
      _
    %p156 = scmp.lt.s32.totalorder %s11, 2
    // Predicated region
    $region21: #{tpu_custom_call.1} parent=5 // pred_check
      %p157 = pneg %p156
    $region22: #{tpu_custom_call.1} parent=5 // pred_check_branch
      %159 = sbr.rel (%p157) target = $region24
    $region23: #{tpu_custom_call.1} parent=5 // pred_region
      // Predicated region
      $region25: #{tpu_custom_call.1} parent=23 // pred_check
        %p160 = pneg %p87
      $region26: #{tpu_custom_call.1} parent=23 // pred_check_branch
        %162 = sbr.rel (%p160) target = $region28
      $region27: #{tpu_custom_call.1} parent=23 // pred_region
        %s163 = smul.u32 2, %s19
        %p164 = scmp.lt.s32.totalorder %s18, 1
        %s165 = scalar_select %p164, %s18, 1
        %p166 = scmp.lt.s32.totalorder %s163, 1
        %s167 = scalar_select %p166, %s163, 1
        %s168 = smul.addr %s165, 2
        %s169 = sadd.s32 %s167, %s168
        %s170 = smul.addr %s169, 8
        %s171 = scalar_lea.vmem %s2, %s170
        %s172 = smul.u32 2, %s19
      $region28: #{tpu_custom_call.1} parent=23 // pred_fallthru
        _
    $region24: #{tpu_custom_call.1} parent=5 // pred_fallthru
      _
    %p173 = scmp.le.s32.totalorder 1, %s11
    %p174 = scmp.lt.s32.totalorder %s11, 3
    %p175 = pnand %p173, %p174
    %p176 = pneg %p175
    // Predicated region
    $region29: #{tpu_custom_call.1} parent=5 // pred_check
      _
    $region30: #{tpu_custom_call.1} parent=5 // pred_check_branch
      %178 = sbr.rel (%p175) target = $region32
    $region31: #{tpu_custom_call.1} parent=5 // pred_region
      %s179 = ssub.s32 %s11, 1
      %p180 = pneg %p44
      %p181 = pneg %p41
      %p182 = pneg %p65
      %p183 = pneg %p62
      %s184 = smul.u32 2, %s21
      %p185 = scmp.lt.s32.totalorder %s20, 1
      %s186 = scalar_select %p185, %s20, 1
      %p187 = scmp.lt.s32.totalorder %s184, 1
      %s188 = scalar_select %p187, %s184, 1
      %s189 = smul.addr %s186, 2
      %s190 = sadd.s32 %s188, %s189
      %s191 = smul.addr %s190, 8
      %s192 = scalar_lea.vmem %s2, %s191
      %p193 = pneg %p93
      %p194 = pneg %p90
      %p195 = pneg %p114
      %p196 = pneg %p111
      %p197 = pneg %p135
      %p198 = pneg %p132
      %s199 = smul.u32 2, %s21
      %p200 = scmp.lt.s32.totalorder %s20, 1
      %s201 = scalar_select %p200, %s20, 1
      %p202 = scmp.lt.s32.totalorder %s199, 1
      %s203 = scalar_select %p202, %s199, 1
      %s204 = smul.addr %s201, 2
      %s205 = sadd.s32 %s203, %s204
      %s206 = smul.addr %s205, 8
      %s207 = scalar_lea.vmem %s2, %s206
      %s208 = smul.u32 2, %s21
      %p209 = scmp.eq.s32.totalorder %s20, 0
      %p210 = scmp.eq.s32.totalorder %s21, 0
      %p211 = pnand %p209, %p210
      %p212 = pneg %p211
      // Predicated region
      $region33: #{tpu_custom_call.1} parent=31 // pred_check
        _
      $region34: #{tpu_custom_call.1} parent=31 // pred_check_branch
        %214 = sbr.rel (%p211) target = $region36
      $region35: #{tpu_custom_call.1} parent=31 // pred_region
        %vm215 = vcmask 7168
        %216 = vst.msk [vmem:[#allocation2] sm:$0xff] %vm215, 0.0
        %217 = vst.msk [vmem:[#allocation2 + $0x8] sm:$0xff] %vm215, 0.0
        %218 = vst.msk [vmem:[#allocation3] sm:$0xff] %vm215, 0.0
        %219 = vst.msk [vmem:[#allocation3 + $0x8] sm:$0xff] %vm215, 0.0
      $region36: #{tpu_custom_call.1} parent=31 // pred_fallthru
        _
      %v220 = vld [vmem:[%s207] sm:$0xff]
      %v221 = vld [vmem:[%s207 + $0x8] sm:$0xff]
      %v222 = vld [vmem:[%s0] sm:$0xff]
      %v223 = vld [vmem:[%s0 + $0x8] sm:$0xff]
      %v224 = vld [vmem:[%s1] sm:$0xff]
      %v225 = vld [vmem:[%s1 + $0x8] sm:$0xff]
      %227 = vset.pattern.permute.xlu0 0
      %228 = vperm.xlu0 %227, %v224
      %v229 = vpop.permute.xlu0 %228
      %232 = vset.pattern.permute.xlu0 0
      %233 = vperm.xlu0 %232, %v225
      %v234 = vpop.permute.xlu0 %233
      %vm236 = vcmask 64512
      %v238 = vsel %vm236, %v222, 0
      %v241 = vsel %vm236, %v223, 0
      %243 = vmatpush.msra.mxu0 0.0
      %244 = vmatpush.msra.mxu0 0.0
      %245 = vmatpush.msra.mxu0 0.0
      %246 = vmatpush.msra.mxu0 0.0
      %247 = vmatpush.msra.mxu0 0.0
      %248 = vmatpush.msra.mxu0 0.0
      %249 = vmatpush.msra.mxu0 0.0
      %250 = vmatpush.msra.mxu0 0.0
      %251 = vmatpush.msra.mxu0 0.0
      %252 = vmatpush.msra.mxu0 0.0
      %253 = vmatpush.msra.mxu0 0.0
      %254 = vmatpush.msra.mxu0 0.0
      %255 = vmatpush.msra.mxu0 0.0
      %256 = vmatpush.msra.mxu0 0.0
      %257 = vmatpush.msra.mxu0 0.0
      %258 = vmatpush.msra.mxu0 %v220
      %259 = vmatmul.f32.gmra.mxu0 %v238
      %v260 = vpop.f32.mrf.mxu0
      %v261 = vadd.f32 %v229, %v260
      %262 = vmatmul.f32.gmra.mxu0 %v241
      %v263 = vpop.f32.mrf.mxu0
      %v264 = vadd.f32 %v234, %v263
      %265 = vdwg.mxu0
      %266 = vmatpush.msra.mxu0 0.0
      %267 = vmatpush.msra.mxu0 0.0
      %268 = vmatpush.msra.mxu0 0.0
      %269 = vmatpush.msra.mxu0 0.0
      %270 = vmatpush.msra.mxu0 0.0
      %271 = vmatpush.msra.mxu0 0.0
      %272 = vmatpush.msra.mxu0 0.0
      %273 = vmatpush.msra.mxu0 0.0
      %274 = vmatpush.msra.mxu0 0.0
      %275 = vmatpush.msra.mxu0 0.0
      %276 = vmatpush.msra.mxu0 0.0
      %277 = vmatpush.msra.mxu0 0.0
      %278 = vmatpush.msra.mxu0 0.0
      %279 = vmatpush.msra.mxu0 0.0
      %280 = vmatpush.msra.mxu0 0.0
      %281 = vmatpush.msra.mxu0 %v221
      %282 = vmatmul.f32.gmra.mxu0 %v238
      %v283 = vpop.f32.mrf.mxu0
      %v284 = vadd.f32 %v229, %v283
      %285 = vmatmul.f32.gmra.mxu0 %v241
      %v286 = vpop.f32.mrf.mxu0
      %v287 = vadd.f32 %v234, %v286
      %288 = vdwg.mxu0
      %v289 = vld [vmem:[#allocation2] sm:$0xff]
      %v290 = vld [vmem:[#allocation2 + $0x8] sm:$0xff]
      %v291 = vadd.f32 %v261, %v284
      %292 = vadd.xlane.f32.xlu0 %v291
      %v293 = vpop.xlane.xlu0 %292
      %v294 = vadd.f32 %v264, %v287
      %295 = vadd.xlane.f32.xlu0 %v294
      %v296 = vpop.xlane.xlu0 %295
      %v297 = vadd.f32 %v289, %v293
      %v298 = vadd.f32 %v290, %v296
      %vm299 = vcmask 7168
      %300 = vst.msk [vmem:[#allocation2] sm:$0xff] %vm299, %v297
      %301 = vst.msk [vmem:[#allocation2 + $0x8] sm:$0xff] %vm299, %v298
      %v302 = vld [vmem:[#allocation3] sm:$0xff]
      %v303 = vld [vmem:[#allocation3 + $0x8] sm:$0xff]
      %v304 = vmul.f32 %v261, %v261
      %v305 = vmul.f32 %v284, %v284
      %v306 = vmul.f32 %v264, %v264
      %v307 = vmul.f32 %v287, %v287
      %v308 = vadd.f32 %v304, %v305
      %309 = vadd.xlane.f32.xlu0 %v308
      %v310 = vpop.xlane.xlu0 %309
      %v311 = vadd.f32 %v306, %v307
      %312 = vadd.xlane.f32.xlu0 %v311
      %v313 = vpop.xlane.xlu0 %312
      %v314 = vadd.f32 %v302, %v310
      %v315 = vadd.f32 %v303, %v313
      %316 = vst.msk [vmem:[#allocation3] sm:$0xff] %vm299, %v314
      %317 = vst.msk [vmem:[#allocation3 + $0x8] sm:$0xff] %vm299, %v315
      %p318 = scmp.eq.s32.totalorder %s20, 1
      %p319 = pnand %p318, %p210
      %p320 = pneg %p319
      // Predicated region
      $region37: #{tpu_custom_call.1} parent=31 // pred_check
        _
      $region38: #{tpu_custom_call.1} parent=31 // pred_check_branch
        %322 = sbr.rel (%p319) target = $region40
      $region39: #{tpu_custom_call.1} parent=31 // pred_region
        %v323 = vld [vmem:[#allocation2] sm:$0xff]
        %v324 = vld [vmem:[#allocation2 + $0x8] sm:$0xff]
        %v325 = vmul.f32 %v323, 0.001953125
        %v326 = vmul.f32 %v324, 0.001953125
        %v327 = vld [vmem:[#allocation3] sm:$0xff]
        %v328 = vld [vmem:[#allocation3 + $0x8] sm:$0xff]
        %v329 = vmul.f32 %v327, 0.001953125
        %v330 = vmul.f32 %v328, 0.001953125
        %v331 = vmul.f32 %v325, %v325
        %v332 = vmul.f32 %v326, %v326
        %v333 = vsub.f32 %v329, %v331
        %v334 = vsub.f32 %v330, %v332
        %335 = vst.msk [vmem:[%s3] sm:$0xff] %vm299, %v325
        %336 = vst.msk [vmem:[%s3 + $0x8] sm:$0xff] %vm299, %v326
        %v337 = vmax.f32 %v333, 0.0
        %v338 = vmax.f32 %v334, 0.0
        %v339 = vadd.f32 %v337, 1e-05
        %v340 = vadd.f32 %v338, 1e-05
        %v341 = vrsqrt.pop %v339
        %v342 = vmul.f32 %v341, %v339
        %v343 = vmul.f32 %v342, %v341
        %v344 = vmul.f32 0.5, %v343
        %v345 = vsub.f32 1.5, %v344
        %v346 = vmul.f32 %v341, %v345
        %vm347 = vweird.f32 %v339
        %vm348 = vweird.f32 %v341
        %vm349 = vmor %vm347, %vm348
        %v350 = vsel %vm349, %v341, %v346
        %v351 = vrsqrt.pop %v340
        %v352 = vmul.f32 %v351, %v340
        %v353 = vmul.f32 %v352, %v351
        %v354 = vmul.f32 0.5, %v353
        %v355 = vsub.f32 1.5, %v354
        %v356 = vmul.f32 %v351, %v355
        %vm357 = vweird.f32 %v340
        %vm358 = vweird.f32 %v351
        %vm359 = vmor %vm357, %vm358
        %v360 = vsel %vm359, %v351, %v356
        %361 = vst.msk [vmem:[%s4] sm:$0xff] %vm299, %v350
        %362 = vst.msk [vmem:[%s4 + $0x8] sm:$0xff] %vm299, %v360
      $region40: #{tpu_custom_call.1} parent=31 // pred_fallthru
        _
      // Predicated region
      $region41: #{tpu_custom_call.1} parent=31 // pred_check
        %p363 = pneg %p111
      $region42: #{tpu_custom_call.1} parent=31 // pred_check_branch
        %365 = sbr.rel (%p363) target = $region44
      $region43: #{tpu_custom_call.1} parent=31 // pred_region
        _
      $region44: #{tpu_custom_call.1} parent=31 // pred_fallthru
        _
      // Predicated region
      $region45: #{tpu_custom_call.1} parent=31 // pred_check
        %p366 = pneg %p132
      $region46: #{tpu_custom_call.1} parent=31 // pred_check_branch
        %368 = sbr.rel (%p366) target = $region48
      $region47: #{tpu_custom_call.1} parent=31 // pred_region
        _
      $region48: #{tpu_custom_call.1} parent=31 // pred_fallthru
        _
      // Predicated region
      $region49: #{tpu_custom_call.1} parent=31 // pred_check
        %p369 = pneg %p111
      $region50: #{tpu_custom_call.1} parent=31 // pred_check_branch
        %371 = sbr.rel (%p369) target = $region52
      $region51: #{tpu_custom_call.1} parent=31 // pred_region
        _
      $region52: #{tpu_custom_call.1} parent=31 // pred_fallthru
        _
      // Predicated region
      $region53: #{tpu_custom_call.1} parent=31 // pred_check
        %p372 = pneg %p132
      $region54: #{tpu_custom_call.1} parent=31 // pred_check_branch
        %374 = sbr.rel (%p372) target = $region56
      $region55: #{tpu_custom_call.1} parent=31 // pred_region
        _
      $region56: #{tpu_custom_call.1} parent=31 // pred_fallthru
        _
    $region32: #{tpu_custom_call.1} parent=5 // pred_fallthru
      _
    %p375 = scmp.le.s32.totalorder 2, %s11
    // Predicated region
    $region57: #{tpu_custom_call.1} parent=5 // pred_check
      %p376 = pneg %p375
    $region58: #{tpu_custom_call.1} parent=5 // pred_check_branch
      %378 = sbr.rel (%p376) target = $region60
    $region59: #{tpu_custom_call.1} parent=5 // pred_region
      %s379 = ssub.s32 %s11, 2
    $region60: #{tpu_custom_call.1} parent=5 // pred_fallthru
      _
  $region6: #{tpu_custom_call.1} parent=0 // loop_footer
    %s15 = sadd.s32 1, %s11
  $region7: #{tpu_custom_call.1} parent=0 // loop_footer_branch
    %10 = sbr.rel target = $region3
  $region8: #{tpu_custom_call.1} parent=0 // loop_exit
    _

</llo_original>
